<compile_context>
chip_gen: v7x
topology: tpu7x:2x2x1
jax: 0.10.0
libtpu: 0.0.40
codegen_flags: <defaults>
</compile_context>

<pallas_src>
import jax
import jax.numpy as jnp
from jax.experimental import pallas as pl
from jax.experimental.pallas import tpu as pltpu

EPS = 1e-5
ALPHA = 0.2


def _matmul_stats_kernel(p_ref, w_ref, y_ref, stats_ref):
    # (TM, Kp) @ (Kp, Cp) -> (TM, Cp), bf16 operands, f32 accumulation on the MXU.
    y = jnp.dot(p_ref[...], w_ref[...], preferred_element_type=jnp.float32)
    y_ref[...] = y
    # Per-tile partial BN statistics (one pass: sum and sum-of-squares).
    s = jnp.sum(y, axis=0, keepdims=True)           # (1, Cp)
    sq = jnp.sum(y * y, axis=0, keepdims=True)      # (1, Cp)
    stats_ref[...] = jnp.concatenate([s, sq], axis=0)[None]   # (1, 2, Cp)


def _bn_act_kernel(y_ref, scale_ref, bias_ref, o_ref):
    # Folded BN affine: one FMA per element, then LeakyReLU(alpha).
    z = y_ref[...] * scale_ref[...] + bias_ref[...]
    o_ref[...] = jnp.where(z >= 0, z, ALPHA * z)


def _round_up(x, m):
    return (x + m - 1) // m * m


def d_block(x, weight, gamma, beta, *, stride=2, padding=1):
    """x: (N, Cin, H, W) NCHW f32; weight: (Cout, Cin, KH, KW) OIHW f32."""
    N, Cin, H, W = x.shape
    Cout, Cin_w, KH, KW = weight.shape
    assert Cin == Cin_w

    Hp, Wp = H + 2 * padding, W + 2 * padding
    Ho = (Hp - KH) // stride + 1
    Wo = (Wp - KW) // stride + 1
    M = N * Ho * Wo
    K = Cin * KH * KW

    # --- glue: im2col in bf16 (halves HBM bytes of the dominant operand) ---
    xb = x.astype(jnp.bfloat16)
    xp = jnp.pad(xb, ((0, 0), (0, 0), (padding, padding), (padding, padding)))
    cols = []
    for kh in range(KH):
        for kw in range(KW):
            cols.append(xp[:, :, kh:kh + stride * Ho:stride, kw:kw + stride * Wo:stride])
    patches = jnp.stack(cols, axis=2)                        # (N, Cin, KH*KW, Ho, Wo)
    # K ordered as (Cin, kh, kw) to match PyTorch weight.reshape(Cout, Cin*KH*KW).
    patches = patches.transpose(0, 3, 4, 1, 2).reshape(M, K)

    # --- pad to MXU / lane-friendly shapes (zeros are numerically inert) ---
    Kp = _round_up(K, 128)
    Cp = _round_up(Cout, 128)
    TM = 512
    if M < TM:
        TM = _round_up(M, 128)
    Mp = _round_up(M, TM)
    nt = Mp // TM

    patches = jnp.pad(patches, ((0, Mp - M), (0, Kp - K)))               # bf16 (Mp, Kp)
    w_mat = weight.reshape(Cout, K).T.astype(jnp.bfloat16)               # (K, Cout)
    w_mat = jnp.pad(w_mat, ((0, Kp - K), (0, Cp - Cout)))                # bf16 (Kp, Cp)

    cparams = pltpu.CompilerParams(
        dimension_semantics=("parallel",),
        vmem_limit_bytes=32 * 1024 * 1024,
    )

    # --- pass A: tiled matmul + per-tile partial BN statistics ---
    y, partial = pl.pallas_call(
        _matmul_stats_kernel,
        out_shape=(
            jax.ShapeDtypeStruct((Mp, Cp), jnp.float32),      # staged conv output
            jax.ShapeDtypeStruct((nt, 2, Cp), jnp.float32),   # per-tile (sum, sumsq)
        ),
        grid=(nt,),
        in_specs=[
            pl.BlockSpec((TM, Kp), lambda i: (i, 0)),         # patches tile
            pl.BlockSpec((Kp, Cp), lambda i: (0, 0)),         # full weight (resident)
        ],
        out_specs=(
            pl.BlockSpec((TM, Cp), lambda i: (i, 0)),
            pl.BlockSpec((1, 2, Cp), lambda i: (i, 0, 0)),
        ),
        compiler_params=cparams,
    )(patches, w_mat)

    # --- tiny glue: global stats + folded BN affine (arrays of size Cp only) ---
    ssum = jnp.sum(partial[:, 0, :], axis=0)                  # (Cp,)
    ssq = jnp.sum(partial[:, 1, :], axis=0)                   # (Cp,)
    mean = ssum / M                                           # divisor = real M (pad rows are zero)
    var = jnp.maximum(ssq / M - mean * mean, 0.0)             # biased variance, clamp cancellation
    gamma_p = jnp.pad(gamma.astype(jnp.float32), (0, Cp - Cout))
    beta_p = jnp.pad(beta.astype(jnp.float32), (0, Cp - Cout))
    scale = gamma_p * jax.lax.rsqrt(var + EPS)
    bias = beta_p - mean * scale

    # --- pass B: normalize + LeakyReLU, tiled over M ---
    out = pl.pallas_call(
        _bn_act_kernel,
        out_shape=jax.ShapeDtypeStruct((Mp, Cp), jnp.float32),
        grid=(nt,),
        in_specs=[
            pl.BlockSpec((TM, Cp), lambda i: (i, 0)),
            pl.BlockSpec((1, Cp), lambda i: (0, 0)),
            pl.BlockSpec((1, Cp), lambda i: (0, 0)),
        ],
        out_specs=pl.BlockSpec((TM, Cp), lambda i: (i, 0)),
        compiler_params=cparams,
    )(y, scale.reshape(1, Cp), bias.reshape(1, Cp))

    # --- back to NCHW (module semantics) ---
    return out[:M, :Cout].reshape(N, Ho, Wo, Cout).transpose(0, 3, 1, 2)


def d_block_reference(x, weight, gamma, beta, *, stride=2, padding=1):
    """Pure-JAX reference with the same bf16-rounded inputs / f32 accumulation
    as the kernel path, so the comparison isolates the Pallas kernels."""
    x32 = x.astype(jnp.bfloat16).astype(jnp.float32)
    w32 = weight.astype(jnp.bfloat16).astype(jnp.float32)
    y = jax.lax.conv_general_dilated(
        x32, w32,
        window_strides=(stride, stride),
        padding=((padding, padding), (padding, padding)),
        dimension_numbers=("NCHW", "OIHW", "NCHW"),
        precision=jax.lax.Precision.HIGHEST,
    )
    mean = y.mean(axis=(0, 2, 3), keepdims=True)
    var = ((y - mean) ** 2).mean(axis=(0, 2, 3), keepdims=True)
    y_hat = (y - mean) * jax.lax.rsqrt(var + EPS)
    y_bn = y_hat * gamma.reshape(1, -1, 1, 1) + beta.reshape(1, -1, 1, 1)
    return jnp.where(y_bn >= 0, y_bn, ALPHA * y_bn)


if __name__ == "__main__":
    key = jax.random.PRNGKey(0)
    k_x, k_w = jax.random.split(key)

    N, Cin, H, W = 2, 3, 16, 16        # module default in_channels=3
    Cout = 8                           # out_channels

    x = jax.random.normal(k_x, (N, Cin, H, W), dtype=jnp.float32)
    weight = 0.1 * jax.random.normal(k_w, (Cout, Cin, 4, 4), dtype=jnp.float32)
    gamma = jnp.ones((Cout,), dtype=jnp.float32)   # BatchNorm2d default weight
    beta = jnp.zeros((Cout,), dtype=jnp.float32)   # BatchNorm2d default bias

    out = jax.block_until_ready(d_block(x, weight, gamma, beta))
    ref = d_block_reference(x, weight, gamma, beta)

    assert out.shape == (N, Cout, H // 2, W // 2), out.shape
    max_err = float(jnp.max(jnp.abs(out - ref)))
    assert jnp.allclose(out, ref, atol=2e-3, rtol=2e-3), max_err

    print("KERNEL_OK")
</pallas_src>

<mosaic_0001>
module attributes {stable_mosaic.version = 11 : i64} {
  func.func @_matmul_stats_kernel(%arg0: i32, %arg1: memref<128x128xbf16, #tpu.memory_space<vmem>>, %arg2: memref<128x128xbf16, #tpu.memory_space<vmem>>, %arg3: memref<128x128xf32, #tpu.memory_space<vmem>>, %arg4: memref<1x2x128xf32, #tpu.memory_space<vmem>>) attributes {dimension_semantics = [#tpu.dimension_semantics<parallel>], iteration_bounds = array<i64: 1>, scalar_prefetch = 0 : i64, scratch_operands = 0 : i64, tpu.core_type = #tpu.core_type<tc>, window_params = [{transform_indices = @transform_0, window_bounds = array<i64: 128, 128>}, {pipeline_mode = #tpu.pipeline_mode<synchronous>, transform_indices = @transform_1, window_bounds = array<i64: 128, 128>}, {transform_indices = @transform_2, window_bounds = array<i64: 128, 128>}, {transform_indices = @transform_3, window_bounds = array<i64: 1, 2, 128>}]} {
    %c0 = arith.constant 0 : index
    %c0_0 = arith.constant 0 : index
    %0 = vector.load %arg1[%c0, %c0_0] : memref<128x128xbf16, #tpu.memory_space<vmem>>, vector<128x128xbf16>
    %c0_1 = arith.constant 0 : index
    %c0_2 = arith.constant 0 : index
    %1 = vector.load %arg2[%c0_1, %c0_2] : memref<128x128xbf16, #tpu.memory_space<vmem>>, vector<128x128xbf16>
    %cst = arith.constant dense<0.000000e+00> : vector<128x128xf32>
    %2 = tpu.matmul %0, %1, %cst {dimension_numbers = #tpu.dot_dimension_numbers<[1], [0], [0], [1], [0, 0, 1, 1], [], []>} : vector<128x128xbf16>, vector<128x128xbf16>, vector<128x128xf32> -> vector<128x128xf32>
    %c0_3 = arith.constant 0 : index
    %c0_4 = arith.constant 0 : index
    %3 = vector.load %arg3[%c0_3, %c0_4] : memref<128x128xf32, #tpu.memory_space<vmem>>, vector<128x128xf32>
    tpu.vector_store %arg3[%c0_3, %c0_4], %2 {strides = array<i32>} : memref<128x128xf32, #tpu.memory_space<vmem>>, vector<128x128xf32>,
    %cst_5 = arith.constant dense<0.000000e+00> : vector<128xf32>
    %4 = vector.multi_reduction <add>, %2, %cst_5 [0] : vector<128x128xf32> to vector<128xf32>
    %5 = vector.shape_cast %4 : vector<128xf32> to vector<1x128xf32>
    %6 = arith.mulf %2, %2 : vector<128x128xf32>
    %cst_6 = arith.constant dense<0.000000e+00> : vector<128xf32>
    %7 = vector.multi_reduction <add>, %6, %cst_6 [0] : vector<128x128xf32> to vector<128xf32>
    %8 = vector.shape_cast %7 : vector<128xf32> to vector<1x128xf32>
    %9 = tpu.concatenate %5, %8 in 0 : vector<1x128xf32>, vector<1x128xf32> -> vector<2x128xf32>
    %10 = vector.shape_cast %9 : vector<2x128xf32> to vector<1x2x128xf32>
    %c0_7 = arith.constant 0 : index
    %c0_8 = arith.constant 0 : index
    %c0_9 = arith.constant 0 : index
    %11 = vector.load %arg4[%c0_7, %c0_8, %c0_9] : memref<1x2x128xf32, #tpu.memory_space<vmem>>, vector<1x2x128xf32>
    tpu.vector_store %arg4[%c0_7, %c0_8, %c0_9], %10 {strides = array<i32>} : memref<1x2x128xf32, #tpu.memory_space<vmem>>, vector<1x2x128xf32>,
    return
  }
  func.func @transform_0(%arg0: i32) -> (i32, i32) {
    %c0_i32 = arith.constant 0 : i32
    %c0_i32_0 = arith.constant 0 : i32
    return %arg0, %c0_i32 : i32, i32
  }
  func.func @transform_1(%arg0: i32) -> (i32, i32) {
    %c0_i32 = arith.constant 0 : i32
    %c0_i32_0 = arith.constant 0 : i32
    %c0_i32_1 = arith.constant 0 : i32
    return %c0_i32, %c0_i32_0 : i32, i32
  }
  func.func @transform_2(%arg0: i32) -> (i32, i32) {
    %c0_i32 = arith.constant 0 : i32
    %c0_i32_0 = arith.constant 0 : i32
    return %arg0, %c0_i32 : i32, i32
  }
  func.func @transform_3(%arg0: i32) -> (i32, i32, i32) {
    %c0_i32 = arith.constant 0 : i32
    %c0_i32_0 = arith.constant 0 : i32
    %c0_i32_1 = arith.constant 0 : i32
    return %arg0, %c0_i32, %c0_i32_0 : i32, i32, i32
  }
}

</mosaic_0001>

<llo_original>
// kernel: tpu_custom_call.1
$region0: #{tpu_custom_call.1}
  #allocation0 [shape = 'u32[]', space=smem, size = 0x4, offset = 0x4, fixed_abs, tag = 'smem constant byte address 0x4 - core index']
  #allocation1 [shape = 'u32[144,128]{1,0:T(1,128)}', space=vmem, size = 0x12000, scoped, tag = 'internal scratch']
  %s0 = inlined_call_operand.hbm [shape: bf16[128,128], index: 0, kind: input, shape index: {}]
  %s1 = inlined_call_operand.hbm [shape: bf16[128,128], index: 1, kind: input, shape index: {}]
  %s2 = inlined_call_operand.hbm [shape: f32[128,128], index: 2, kind: output, shape index: {0}]
  %s3 = inlined_call_operand.hbm [shape: f32[1,2,128], index: 3, kind: output, shape index: {1}]
  %4 = xla_tuple %s2, %s3
  %s5 = sld [smem:[#allocation0]]
  $region34: #{tpu_custom_call.1} parent=0
    _
  %s7 = ssub.s32 1, %s5
  %s8 = scalar_select 0, %s7, %s5
  $region1: #{tpu_custom_call.1} parent=0
    #allocation2 [shape = 'u8[32768]{0}', space=vmem, size = 0x8000, scoped, tag = 'input window, operand 0, single buffered']
    #allocation3 [shape = 's32[1]{0}', space=sflag, size = 0x4, scoped, tag = 'scoped memory for tpu_custom_call.1']
    #allocation4 [shape = 's32[1]{0}', space=sflag, size = 0x4, scoped, tag = 'scoped memory for tpu_custom_call.1']
    #allocation5 [shape = 'u8[32768]{0}', space=vmem, size = 0x8000, scoped, tag = 'input window, operand 1, single buffered']
    #allocation6 [shape = 's32[1]{0}', space=sflag, size = 0x4, scoped, tag = 'scoped memory for tpu_custom_call.1']
    #allocation7 [shape = 'u8[65536]{0}', space=vmem, size = 0x10000, scoped, tag = 'output window, operand 0, single buffered']
    #allocation8 [shape = 'u8[1024]{0}', space=vmem, size = 0x400, scoped, tag = 'output window, operand 1, single buffered']
    #allocation9 [shape = 's32[1]{0}', space=sflag, size = 0x4, scoped, tag = 'scoped memory for tpu_custom_call.1']
    %9 = vsyncpa [#allocation3], 0
    %10 = vsyncpa [#allocation6], 0
    %11 = vsyncpa [#allocation4], 0
    %12 = vsyncpa [#allocation9], 0
    // Predicated region
    $region2: #{tpu_custom_call.1} parent=1 // pred_check
      _
    $region3: #{tpu_custom_call.1} parent=1 // pred_check_branch
      %14 = sbr.rel (0) target = $region5
    $region4: #{tpu_custom_call.1} parent=1 // pred_region
      %s16 = ssub.s32 1024, 1024
      %17 = vsyncadd [#allocation3], %s16
      %s18 = sshll.u32 [#allocation2], 4
      %s19 = int_to_ptr.vmem [resolvable:$true] %s18
      %24 = dma.hbm_to_vmem [thread:$0]  %s0, 1024, %s19, [#allocation3], 64, 64, 4
    $region5: #{tpu_custom_call.1} parent=1 // pred_fallthru
      _
    // Predicated region
    $region6: #{tpu_custom_call.1} parent=1 // pred_check
      _
    $region7: #{tpu_custom_call.1} parent=1 // pred_check_branch
      %26 = sbr.rel (0) target = $region9
    $region8: #{tpu_custom_call.1} parent=1 // pred_region
      %s28 = ssub.s32 1024, 1024
      %29 = vsyncadd [#allocation6], %s28
      %s30 = sshll.u32 [#allocation5], 4
      %s31 = int_to_ptr.vmem [resolvable:$true] %s30
      %36 = dma.hbm_to_vmem [thread:$0]  %s1, 1024, %s31, [#allocation6], 64, 64, 4
    $region9: #{tpu_custom_call.1} parent=1 // pred_fallthru
      _
    // Predicated region
    $region10: #{tpu_custom_call.1} parent=1 // pred_check
      _
    $region11: #{tpu_custom_call.1} parent=1 // pred_check_branch
      %38 = sbr.rel (0) target = $region13
    $region12: #{tpu_custom_call.1} parent=1 // pred_region
      %39 = dma.done [#allocation3], 1024
    $region13: #{tpu_custom_call.1} parent=1 // pred_fallthru
      _
    // Predicated region
    $region14: #{tpu_custom_call.1} parent=1 // pred_check
      _
    $region15: #{tpu_custom_call.1} parent=1 // pred_check_branch
      %41 = sbr.rel (0) target = $region17
    $region16: #{tpu_custom_call.1} parent=1 // pred_region
      %42 = dma.done [#allocation6], 1024
    $region17: #{tpu_custom_call.1} parent=1 // pred_fallthru
      _
    %v44 = vld [vmem:[#allocation2] sm:$0xf]
    %v45 = vld [vmem:[#allocation2 + $0x4] sm:$0xf]
    %v46 = vld [vmem:[#allocation2 + $0x8] sm:$0xf]
    %v47 = vld [vmem:[#allocation2 + $0xc] sm:$0xf]
    %v48 = vld [vmem:[#allocation2 + $0x10] sm:$0xf]
    %v49 = vld [vmem:[#allocation2 + $0x14] sm:$0xf]
    %v50 = vld [vmem:[#allocation2 + $0x18] sm:$0xf]
    %v51 = vld [vmem:[#allocation2 + $0x1c] sm:$0xf]
    %v52 = vld [vmem:[#allocation2 + $0x20] sm:$0xf]
    %v53 = vld [vmem:[#allocation2 + $0x24] sm:$0xf]
    %v54 = vld [vmem:[#allocation2 + $0x28] sm:$0xf]
    %v55 = vld [vmem:[#allocation2 + $0x2c] sm:$0xf]
    %v56 = vld [vmem:[#allocation2 + $0x30] sm:$0xf]
    %v57 = vld [vmem:[#allocation2 + $0x34] sm:$0xf]
    %v58 = vld [vmem:[#allocation2 + $0x38] sm:$0xf]
    %v59 = vld [vmem:[#allocation2 + $0x3c] sm:$0xf]
    %v60 = vld [vmem:[#allocation5] sm:$0xf]
    %v61 = vld [vmem:[#allocation5 + $0x4] sm:$0xf]
    %v62 = vld [vmem:[#allocation5 + $0x8] sm:$0xf]
    %v63 = vld [vmem:[#allocation5 + $0xc] sm:$0xf]
    %v64 = vld [vmem:[#allocation5 + $0x10] sm:$0xf]
    %v65 = vld [vmem:[#allocation5 + $0x14] sm:$0xf]
    %v66 = vld [vmem:[#allocation5 + $0x18] sm:$0xf]
    %v67 = vld [vmem:[#allocation5 + $0x1c] sm:$0xf]
    %v68 = vld [vmem:[#allocation5 + $0x20] sm:$0xf]
    %v69 = vld [vmem:[#allocation5 + $0x24] sm:$0xf]
    %v70 = vld [vmem:[#allocation5 + $0x28] sm:$0xf]
    %v71 = vld [vmem:[#allocation5 + $0x2c] sm:$0xf]
    %v72 = vld [vmem:[#allocation5 + $0x30] sm:$0xf]
    %v73 = vld [vmem:[#allocation5 + $0x34] sm:$0xf]
    %v74 = vld [vmem:[#allocation5 + $0x38] sm:$0xf]
    %v75 = vld [vmem:[#allocation5 + $0x3c] sm:$0xf]
    %v92 = vunpack.c.l.b16 %v44
    %v93 = vunpack.c.l.b16 %v45
    %v94 = vunpack.c.l.b16 %v46
    %v95 = vunpack.c.l.b16 %v47
    %v96 = vunpack.c.l.b16 %v48
    %v97 = vunpack.c.l.b16 %v49
    %v98 = vunpack.c.l.b16 %v50
    %v99 = vunpack.c.l.b16 %v51
    %v100 = vunpack.c.l.b16 %v52
    %v101 = vunpack.c.l.b16 %v53
    %v102 = vunpack.c.l.b16 %v54
    %v103 = vunpack.c.l.b16 %v55
    %v104 = vunpack.c.l.b16 %v56
    %v105 = vunpack.c.l.b16 %v57
    %v106 = vunpack.c.l.b16 %v58
    %v107 = vunpack.c.l.b16 %v59
    %v108 = vpack.c.b16 %v93, %v92
    %v109 = vpack.c.b16 %v95, %v94
    %v110 = vpack.c.b16 %v97, %v96
    %v111 = vpack.c.b16 %v99, %v98
    %v112 = vpack.c.b16 %v101, %v100
    %v113 = vpack.c.b16 %v103, %v102
    %v114 = vpack.c.b16 %v105, %v104
    %v115 = vpack.c.b16 %v107, %v106
    %v140 = vunpack.c.l.b16 %v60
    %v141 = vunpack.c.l.b16 %v61
    %v142 = vunpack.c.l.b16 %v62
    %v143 = vunpack.c.l.b16 %v63
    %v144 = vunpack.c.l.b16 %v64
    %v145 = vunpack.c.l.b16 %v65
    %v146 = vunpack.c.l.b16 %v66
    %v147 = vunpack.c.l.b16 %v67
    %v148 = vunpack.c.l.b16 %v68
    %v149 = vunpack.c.l.b16 %v69
    %v150 = vunpack.c.l.b16 %v70
    %v151 = vunpack.c.l.b16 %v71
    %v152 = vunpack.c.l.b16 %v72
    %v153 = vunpack.c.l.b16 %v73
    %v154 = vunpack.c.l.b16 %v74
    %v155 = vunpack.c.l.b16 %v75
    %v156 = vpack.c.b16 %v141, %v140
    %v157 = vpack.c.b16 %v143, %v142
    %v158 = vpack.c.b16 %v145, %v144
    %v159 = vpack.c.b16 %v147, %v146
    %v160 = vpack.c.b16 %v149, %v148
    %v161 = vpack.c.b16 %v151, %v150
    %v162 = vpack.c.b16 %v153, %v152
    %v163 = vpack.c.b16 %v155, %v154
    %172 = vmatprep.subr.bf16.mxu0 0
    %173 = vmatpush1.bf16.msra.mxu0 %v156
    %174 = vmatprep.subr.bf16.mxu0 0
    %175 = vmatpush1.bf16.msra.mxu0 %v157
    %176 = vmatprep.subr.bf16.mxu0 0
    %177 = vmatpush1.bf16.msra.mxu0 %v158
    %178 = vmatprep.subr.bf16.mxu0 0
    %179 = vmatpush1.bf16.msra.mxu0 %v159
    %180 = vmatprep.subr.bf16.mxu0 0
    %181 = vmatpush1.bf16.msra.mxu0 %v160
    %182 = vmatprep.subr.bf16.mxu0 0
    %183 = vmatpush1.bf16.msra.mxu0 %v161
    %184 = vmatprep.subr.bf16.mxu0 0
    %185 = vmatpush1.bf16.msra.mxu0 %v162
    %186 = vmatprep.subr.bf16.mxu0 0
    %187 = vmatpush1.bf16.msra.mxu0 %v163
    %188 = vmatprep.subr.bf16.mxu0 0
    %189 = vmatpush1.bf16.msra.mxu0 0
    %190 = vmatprep.subr.bf16.mxu0 0
    %191 = vmatpush1.bf16.msra.mxu0 0
    %192 = vmatprep.subr.bf16.mxu0 0
    %193 = vmatpush1.bf16.msra.mxu0 0
    %194 = vmatprep.subr.bf16.mxu0 0
    %195 = vmatpush1.bf16.msra.mxu0 0
    %196 = vmatprep.subr.bf16.mxu0 0
    %197 = vmatpush1.bf16.msra.mxu0 0
    %198 = vmatprep.subr.bf16.mxu0 0
    %199 = vmatpush1.bf16.msra.mxu0 0
    %200 = vmatprep.subr.bf16.mxu0 0
    %201 = vmatpush1.bf16.msra.mxu0 0
    %202 = vmatprep.subr.bf16.mxu0 0
    %203 = vmatpush1.bf16.msra.mxu0 0
    %204 = vmatprep.mubr.bf16.mxu0 0
    %205 = vmatmul.mubr.bf16.gmra.mrb[0].mxu0 %v108
    %v206 = vpop.f32.mrb[0].mxu0
    %v207 = vadd.f32 0.0, %v206
    %v208 = vpop.f32.mrb[0].mxu0
    %v209 = vpop.f32.mrb[0].mxu0
    %v210 = vadd.f32 0.0, %v209
    %v211 = vpop.f32.mrb[0].mxu0
    %212 = vmatprep.mubr.bf16.mxu0 0
    %213 = vmatmul.mubr.bf16.gmra.mrb[0].mxu0 %v109
    %v214 = vpop.f32.mrb[0].mxu0
    %v215 = vadd.f32 0.0, %v214
    %v216 = vpop.f32.mrb[0].mxu0
    %v217 = vpop.f32.mrb[0].mxu0
    %v218 = vadd.f32 0.0, %v217
    %v219 = vpop.f32.mrb[0].mxu0
    %220 = vmatprep.mubr.bf16.mxu0 0
    %221 = vmatmul.mubr.bf16.gmra.mrb[0].mxu0 %v110
    %v222 = vpop.f32.mrb[0].mxu0
    %v223 = vadd.f32 0.0, %v222
    %v224 = vpop.f32.mrb[0].mxu0
    %v225 = vpop.f32.mrb[0].mxu0
    %v226 = vadd.f32 0.0, %v225
    %v227 = vpop.f32.mrb[0].mxu0
    %228 = vmatprep.mubr.bf16.mxu0 0
    %229 = vmatmul.mubr.bf16.gmra.mrb[0].mxu0 %v111
    %v230 = vpop.f32.mrb[0].mxu0
    %v231 = vadd.f32 0.0, %v230
    %v232 = vpop.f32.mrb[0].mxu0
    %v233 = vpop.f32.mrb[0].mxu0
    %v234 = vadd.f32 0.0, %v233
    %v235 = vpop.f32.mrb[0].mxu0
    %236 = vmatprep.mubr.bf16.mxu0 0
    %237 = vmatmul.mubr.bf16.gmra.mrb[0].mxu0 %v112
    %v238 = vpop.f32.mrb[0].mxu0
    %v239 = vadd.f32 0.0, %v238
    %v240 = vpop.f32.mrb[0].mxu0
    %v241 = vpop.f32.mrb[0].mxu0
    %v242 = vadd.f32 0.0, %v241
    %v243 = vpop.f32.mrb[0].mxu0
    %244 = vmatprep.mubr.bf16.mxu0 0
    %245 = vmatmul.mubr.bf16.gmra.mrb[0].mxu0 %v113
    %v246 = vpop.f32.mrb[0].mxu0
    %v247 = vadd.f32 0.0, %v246
    %v248 = vpop.f32.mrb[0].mxu0
    %v249 = vpop.f32.mrb[0].mxu0
    %v250 = vadd.f32 0.0, %v249
    %v251 = vpop.f32.mrb[0].mxu0
    %252 = vmatprep.mubr.bf16.mxu0 0
    %253 = vmatmul.mubr.bf16.gmra.mrb[0].mxu0 %v114
    %v254 = vpop.f32.mrb[0].mxu0
    %v255 = vadd.f32 0.0, %v254
    %v256 = vpop.f32.mrb[0].mxu0
    %v257 = vpop.f32.mrb[0].mxu0
    %v258 = vadd.f32 0.0, %v257
    %v259 = vpop.f32.mrb[0].mxu0
    %260 = vmatprep.mubr.bf16.mxu0 0
    %261 = vmatmul.mubr.bf16.gmra.mrb[0].mxu0 %v115
    %v262 = vpop.f32.mrb[0].mxu0
    %v263 = vadd.f32 0.0, %v262
    %v264 = vpop.f32.mrb[0].mxu0
    %v265 = vpop.f32.mrb[0].mxu0
    %v266 = vadd.f32 0.0, %v265
    %v267 = vpop.f32.mrb[0].mxu0
    %268 = vdwg.mxu0
    %269 = vst [vmem:[#allocation7] sm:$0xff] %v207
    %270 = vst [vmem:[#allocation7 + $0x8] sm:$0xff] %v210
    %271 = vst [vmem:[#allocation7 + $0x10] sm:$0xff] %v215
    %272 = vst [vmem:[#allocation7 + $0x18] sm:$0xff] %v218
    %273 = vst [vmem:[#allocation7 + $0x20] sm:$0xff] %v223
    %274 = vst [vmem:[#allocation7 + $0x28] sm:$0xff] %v226
    %275 = vst [vmem:[#allocation7 + $0x30] sm:$0xff] %v231
    %276 = vst [vmem:[#allocation7 + $0x38] sm:$0xff] %v234
    %277 = vst [vmem:[#allocation7 + $0x40] sm:$0xff] %v239
    %278 = vst [vmem:[#allocation7 + $0x48] sm:$0xff] %v242
    %279 = vst [vmem:[#allocation7 + $0x50] sm:$0xff] %v247
    %280 = vst [vmem:[#allocation7 + $0x58] sm:$0xff] %v250
    %281 = vst [vmem:[#allocation7 + $0x60] sm:$0xff] %v255
    %282 = vst [vmem:[#allocation7 + $0x68] sm:$0xff] %v258
    %283 = vst [vmem:[#allocation7 + $0x70] sm:$0xff] %v263
    %284 = vst [vmem:[#allocation7 + $0x78] sm:$0xff] %v266
    %v285 = vadd.f32 %v207, %v210
    %v286 = vadd.f32 %v285, %v215
    %v287 = vadd.f32 %v286, %v218
    %v288 = vadd.f32 %v287, %v223
    %v289 = vadd.f32 %v288, %v226
    %v290 = vadd.f32 %v289, %v231
    %v291 = vadd.f32 %v290, %v234
    %v292 = vadd.f32 %v291, %v239
    %v293 = vadd.f32 %v292, %v242
    %v294 = vadd.f32 %v293, %v247
    %v295 = vadd.f32 %v294, %v250
    %v296 = vadd.f32 %v295, %v255
    %v297 = vadd.f32 %v296, %v258
    %v298 = vadd.f32 %v297, %v263
    %v299 = vadd.f32 %v298, %v266
    %v300 = vrot.slane %v299, 4
    %v301 = vadd.f32 %v299, %v300
    %v302 = vrot.slane %v301, 2
    %v303 = vadd.f32 %v301, %v302
    %v304 = vrot.slane %v303, 1
    %v305 = vadd.f32 %v303, %v304
    %v306 = vmul.f32 %v207, %v207
    %v307 = vmul.f32 %v210, %v210
    %v308 = vmul.f32 %v215, %v215
    %v309 = vmul.f32 %v218, %v218
    %v310 = vmul.f32 %v223, %v223
    %v311 = vmul.f32 %v226, %v226
    %v312 = vmul.f32 %v231, %v231
    %v313 = vmul.f32 %v234, %v234
    %v314 = vmul.f32 %v239, %v239
    %v315 = vmul.f32 %v242, %v242
    %v316 = vmul.f32 %v247, %v247
    %v317 = vmul.f32 %v250, %v250
    %v318 = vmul.f32 %v255, %v255
    %v319 = vmul.f32 %v258, %v258
    %v320 = vmul.f32 %v263, %v263
    %v321 = vmul.f32 %v266, %v266
    %v322 = vadd.f32 %v306, %v307
    %v323 = vadd.f32 %v322, %v308
    %v324 = vadd.f32 %v323, %v309
    %v325 = vadd.f32 %v324, %v310
    %v326 = vadd.f32 %v325, %v311
    %v327 = vadd.f32 %v326, %v312
    %v328 = vadd.f32 %v327, %v313
    %v329 = vadd.f32 %v328, %v314
    %v330 = vadd.f32 %v329, %v315
    %v331 = vadd.f32 %v330, %v316
    %v332 = vadd.f32 %v331, %v317
    %v333 = vadd.f32 %v332, %v318
    %v334 = vadd.f32 %v333, %v319
    %v335 = vadd.f32 %v334, %v320
    %v336 = vadd.f32 %v335, %v321
    %v337 = vrot.slane %v336, 4
    %v338 = vadd.f32 %v336, %v337
    %v339 = vrot.slane %v338, 2
    %v340 = vadd.f32 %v338, %v339
    %v341 = vrot.slane %v340, 1
    %v342 = vadd.f32 %v340, %v341
    %vm343 = vcmask 1040384
    %v344 = vsel %vm343, %v305, %v342
    %345 = vst [vmem:[#allocation8] sm:$0x3] %v344
    // Predicated region
    $region18: #{tpu_custom_call.1} parent=1 // pred_check
      _
    $region19: #{tpu_custom_call.1} parent=1 // pred_check_branch
      %347 = sbr.rel (0) target = $region21
    $region20: #{tpu_custom_call.1} parent=1 // pred_region
      %s349 = ssub.s32 2048, 2048
      %350 = vsyncadd [#allocation4], %s349
      %s351 = sshll.u32 [#allocation7], 4
      %s352 = int_to_ptr.vmem [resolvable:$true] %s351
      %357 = dma.vmem_to_hbm [thread:$0]  %s352, 2048, %s2, [#allocation4], 128, 128, 8
    $region21: #{tpu_custom_call.1} parent=1 // pred_fallthru
      _
    // Predicated region
    $region22: #{tpu_custom_call.1} parent=1 // pred_check
      _
    $region23: #{tpu_custom_call.1} parent=1 // pred_check_branch
      %359 = sbr.rel (0) target = $region25
    $region24: #{tpu_custom_call.1} parent=1 // pred_region
      %s361 = ssub.s32 32, 32
      %362 = vsyncadd [#allocation9], %s361
      %s364 = sshll.u32 [#allocation8], 4
      %s365 = int_to_ptr.vmem [resolvable:$true] %s364
      %367 = dma.vmem_to_hbm [thread:$0]  %s365, 32, %s3, [#allocation9]
    $region25: #{tpu_custom_call.1} parent=1 // pred_fallthru
      _
    // Predicated region
    $region26: #{tpu_custom_call.1} parent=1 // pred_check
      _
    $region27: #{tpu_custom_call.1} parent=1 // pred_check_branch
      %369 = sbr.rel (0) target = $region29
    $region28: #{tpu_custom_call.1} parent=1 // pred_region
      %370 = dma.done [#allocation4], 2048
    $region29: #{tpu_custom_call.1} parent=1 // pred_fallthru
      _
    // Predicated region
    $region30: #{tpu_custom_call.1} parent=1 // pred_check
      _
    $region31: #{tpu_custom_call.1} parent=1 // pred_check_branch
      %372 = sbr.rel (0) target = $region33
    $region32: #{tpu_custom_call.1} parent=1 // pred_region
      %373 = dma.done [#allocation9], 32
    $region33: #{tpu_custom_call.1} parent=1 // pred_fallthru
      _
    %374 = vsyncpa [#allocation3], 1
    %375 = vsyncpa [#allocation6], 1
    %376 = vsyncpa [#allocation4], 1
    %377 = vsyncpa [#allocation9], 1

</llo_original>
